<compile_context>
chip_gen: v7x
topology: tpu7x:2x2x1
jax: 0.10.0
libtpu: 0.0.40
codegen_flags: <defaults>
</compile_context>

<pallas_src>
import jax
import jax.numpy as jnp
import numpy as np
from jax.experimental import pallas as pl
from jax.experimental.pallas import tpu as pltpu


def _bq_kernel(x_ref, w1_ref, b1_ref, w2_ref, b2_ref, wq_ref, bq_ref, q_ref):
    """Whole BranchingQNetwork forward on one (BM, obs) batch tile: 3 matmuls."""
    w_dtype = w1_ref.dtype
    x = x_ref[...].astype(w_dtype)                                    # (BM, obs)

    # trunk MLP: Linear -> ReLU -> Linear -> ReLU  (bias-add / ReLU kept in f32)
    h1 = jnp.dot(x, w1_ref[...], preferred_element_type=jnp.float32) + b1_ref[...]
    h1 = jnp.maximum(h1, 0.0)                                         # (BM, 512) f32
    h2 = jnp.dot(h1.astype(w_dtype), w2_ref[...],
                 preferred_element_type=jnp.float32) + b2_ref[...]
    h2 = jnp.maximum(h2, 0.0)                                         # (BM, 256) f32

    # fused (value + centered-advantage) head: q_flat = h2 @ wq + bq
    q = jnp.dot(h2.astype(w_dtype), wq_ref[...],
                preferred_element_type=jnp.float32) + bq_ref[...]     # (BM, A*n)
    q_ref[...] = q.astype(q_ref.dtype)


def _fold_heads(wv, bv, wa, ba, ac_dim, n):
    """Fold value head + per-head mean subtraction into one (256, ac_dim*n) head.

    q_flat = value * 1 + advs_flat @ C  where C is block-diag of (I_n - J_n/n).
    Since value = h2 @ wv + bv and advs_flat = h2 @ wa + ba, this is exactly
    q_flat = h2 @ (wa @ C + wv @ ones) + (ba @ C + bv).
    """
    center = jnp.eye(n, dtype=jnp.float32) - jnp.full((n, n), 1.0 / n, jnp.float32)
    C = jnp.kron(jnp.eye(ac_dim, dtype=jnp.float32), center)          # (A*n, A*n)
    ones_row = jnp.ones((1, ac_dim * n), jnp.float32)
    wq = wa @ C + wv @ ones_row                                       # (256, A*n)
    bq = ba @ C + bv                                                  # (1, A*n)
    return wq, bq


def branching_q_forward(x, params, ac_dim, n, *, block_m=256,
                        param_dtype=jnp.float32):
    """Batch-gridded pallas_call; weights stay VMEM-resident across grid steps.

    Note: for tiny inference batches (a handful of rows) the plain-JAX path is
    at least as fast (per-invocation overhead dominates); the Pallas path is
    meant for large training batches.
    """
    w1, b1, w2, b2, wv, bv, wa, ba = params
    batch, obs = x.shape
    out_cols = ac_dim * n

    # Fold heads and (optionally) cast the matmul weights once, outside the kernel.
    wq, bq = _fold_heads(wv, bv, wa, ba, ac_dim, n)
    w1c = w1.astype(param_dtype)
    w2c = w2.astype(param_dtype)
    wqc = wq.astype(param_dtype)

    # Batch tile: whole batch if it fits in one tile, else block_m rows
    # (block_m must be a multiple of 8; 128 is a good choice on v5e, 256 on v6e/v7x).
    bm = batch if batch <= block_m else block_m
    if bm < batch and bm % 8 != 0:
        raise ValueError("block_m must be a multiple of 8 when tiling the batch")
    grid = (pl.cdiv(batch, bm),)

    def full_block(a):
        # Constant block index -> DMA'd once, resident across all grid steps.
        return pl.BlockSpec(a.shape, lambda i: (0, 0))

    q_flat = pl.pallas_call(
        _bq_kernel,
        out_shape=jax.ShapeDtypeStruct((batch, out_cols), jnp.float32),
        grid=grid,
        in_specs=[
            pl.BlockSpec((bm, obs), lambda i: (i, 0)),   # x: streamed per tile
            full_block(w1c), full_block(b1),
            full_block(w2c), full_block(b2),
            full_block(wqc), full_block(bq),
        ],
        out_specs=pl.BlockSpec((bm, out_cols), lambda i: (i, 0)),
        compiler_params=pltpu.CompilerParams(
            dimension_semantics=("parallel",)),          # v7x: shard across 2 TCs
    )(x, w1c, b1, w2c, b2, wqc, bq)

    # Reshape to (batch, ac_dim, n) outside the kernel: free layout plumbing.
    return q_flat.reshape(batch, ac_dim, n)


def init_params(key, obs, ac_dim, n):
    """PyTorch-Linear-style init: U(-1/sqrt(fan_in), 1/sqrt(fan_in)).

    Weights are stored transposed relative to torch ((in, out)); biases as
    (1, out) rows. The ac_dim advantage heads are concatenated on the out axis.
    """
    ks = jax.random.split(key, 8)

    def lin(kw, kb, fan_in, fan_out):
        bound = 1.0 / np.sqrt(fan_in)
        w = jax.random.uniform(kw, (fan_in, fan_out), jnp.float32, -bound, bound)
        b = jax.random.uniform(kb, (1, fan_out), jnp.float32, -bound, bound)
        return w, b

    w1, b1 = lin(ks[0], ks[1], obs, 512)
    w2, b2 = lin(ks[2], ks[3], 512, 256)
    wv, bv = lin(ks[4], ks[5], 256, 1)
    wa, ba = lin(ks[6], ks[7], 256, ac_dim * n)   # fused adv heads
    return (w1, b1, w2, b2, wv, bv, wa, ba)


def reference_forward(x, params, ac_dim, n):
    """Host-side float64 numpy reference mirroring the PyTorch forward."""
    w1, b1, w2, b2, wv, bv, wa, ba = [np.asarray(p, np.float64) for p in params]
    xv = np.asarray(x, np.float64)
    h1 = np.maximum(xv @ w1 + b1, 0.0)
    h2 = np.maximum(h1 @ w2 + b2, 0.0)
    value = h2 @ wv + bv                                      # (B, 1)
    advs = (h2 @ wa + ba).reshape(xv.shape[0], ac_dim, n)     # (B, ac_dim, n)
    return value[:, :, None] + advs - advs.mean(axis=2, keepdims=True)


# TODO(synk): adv_gradient_rescale is a training-time gradient hook (divides adv-head
# grads by 1 + ac_dim); it has no forward-pass / Pallas equivalent and is omitted.


if __name__ == "__main__":
    obs, ac_dim, n = 32, 4, 8

    key = jax.random.PRNGKey(0)
    kx, kp, kx2 = jax.random.split(key, 3)
    params = init_params(kp, obs, ac_dim, n)

    # 1) Tiny-batch f32 path (single grid step, tight tolerance).
    x = jax.random.normal(kx, (2, obs), dtype=jnp.float32)
    q = jax.block_until_ready(branching_q_forward(x, params, ac_dim, n))
    q_ref = reference_forward(x, params, ac_dim, n)
    np.testing.assert_allclose(np.asarray(q), q_ref, rtol=1e-4, atol=1e-4)
    assert q.shape == (2, ac_dim, n)

    # 2) Gridded bf16-weight path (exercises batch tiling / parallel axis; loose tol).
    x2 = jax.random.normal(kx2, (64, obs), dtype=jnp.float32)
    q2 = jax.block_until_ready(
        branching_q_forward(x2, params, ac_dim, n, block_m=16,
                            param_dtype=jnp.bfloat16))
    q2_ref = reference_forward(x2, params, ac_dim, n)
    np.testing.assert_allclose(np.asarray(q2), q2_ref, rtol=1e-1, atol=1e-1)
    assert q2.shape == (64, ac_dim, n)

    print("KERNEL_OK")
</pallas_src>

<mosaic_0001>
module attributes {stable_mosaic.version = 11 : i64} {
  func.func @_bq_kernel(%arg0: i32, %arg1: memref<2x32xf32, #tpu.memory_space<vmem>>, %arg2: memref<32x512xf32, #tpu.memory_space<vmem>>, %arg3: memref<1x512xf32, #tpu.memory_space<vmem>>, %arg4: memref<512x256xf32, #tpu.memory_space<vmem>>, %arg5: memref<1x256xf32, #tpu.memory_space<vmem>>, %arg6: memref<256x32xf32, #tpu.memory_space<vmem>>, %arg7: memref<1x32xf32, #tpu.memory_space<vmem>>, %arg8: memref<2x32xf32, #tpu.memory_space<vmem>>) attributes {dimension_semantics = [#tpu.dimension_semantics<parallel>], iteration_bounds = array<i64: 1>, scalar_prefetch = 0 : i64, scratch_operands = 0 : i64, tpu.core_type = #tpu.core_type<tc>, window_params = [{transform_indices = @transform_0, window_bounds = array<i64: 2, 32>}, {pipeline_mode = #tpu.pipeline_mode<synchronous>, transform_indices = @transform_1, window_bounds = array<i64: 32, 512>}, {pipeline_mode = #tpu.pipeline_mode<synchronous>, transform_indices = @transform_2, window_bounds = array<i64: 1, 512>}, {pipeline_mode = #tpu.pipeline_mode<synchronous>, transform_indices = @transform_3, window_bounds = array<i64: 512, 256>}, {pipeline_mode = #tpu.pipeline_mode<synchronous>, transform_indices = @transform_4, window_bounds = array<i64: 1, 256>}, {pipeline_mode = #tpu.pipeline_mode<synchronous>, transform_indices = @transform_5, window_bounds = array<i64: 256, 32>}, {pipeline_mode = #tpu.pipeline_mode<synchronous>, transform_indices = @transform_6, window_bounds = array<i64: 1, 32>}, {transform_indices = @transform_7, window_bounds = array<i64: 2, 32>}]} {
    %c0 = arith.constant 0 : index
    %c0_0 = arith.constant 0 : index
    %0 = vector.load %arg1[%c0, %c0_0] : memref<2x32xf32, #tpu.memory_space<vmem>>, vector<2x32xf32>
    %c0_1 = arith.constant 0 : index
    %c0_2 = arith.constant 0 : index
    %1 = vector.load %arg2[%c0_1, %c0_2] : memref<32x512xf32, #tpu.memory_space<vmem>>, vector<32x512xf32>
    %cst = arith.constant dense<0.000000e+00> : vector<2x512xf32>
    %2 = tpu.matmul %0, %1, %cst {dimension_numbers = #tpu.dot_dimension_numbers<[1], [0], [0], [1], [0, 0, 1, 1], [], []>} : vector<2x32xf32>, vector<32x512xf32>, vector<2x512xf32> -> vector<2x512xf32>
    %c0_3 = arith.constant 0 : index
    %c0_4 = arith.constant 0 : index
    %3 = vector.load %arg3[%c0_3, %c0_4] : memref<1x512xf32, #tpu.memory_space<vmem>>, vector<1x512xf32>
    %4 = vector.broadcast %3 : vector<1x512xf32> to vector<2x512xf32>
    %5 = arith.addf %2, %4 : vector<2x512xf32>
    %cst_5 = arith.constant 0.000000e+00 : f32
    %6 = vector.broadcast %cst_5 : f32 to vector<2x512xf32>
    %7 = arith.maximumf %5, %6 : vector<2x512xf32>
    %c0_6 = arith.constant 0 : index
    %c0_7 = arith.constant 0 : index
    %8 = vector.load %arg4[%c0_6, %c0_7] : memref<512x256xf32, #tpu.memory_space<vmem>>, vector<512x256xf32>
    %cst_8 = arith.constant dense<0.000000e+00> : vector<2x256xf32>
    %9 = tpu.matmul %7, %8, %cst_8 {dimension_numbers = #tpu.dot_dimension_numbers<[1], [0], [0], [1], [0, 0, 1, 1], [], []>} : vector<2x512xf32>, vector<512x256xf32>, vector<2x256xf32> -> vector<2x256xf32>
    %c0_9 = arith.constant 0 : index
    %c0_10 = arith.constant 0 : index
    %10 = vector.load %arg5[%c0_9, %c0_10] : memref<1x256xf32, #tpu.memory_space<vmem>>, vector<1x256xf32>
    %11 = vector.broadcast %10 : vector<1x256xf32> to vector<2x256xf32>
    %12 = arith.addf %9, %11 : vector<2x256xf32>
    %cst_11 = arith.constant 0.000000e+00 : f32
    %13 = vector.broadcast %cst_11 : f32 to vector<2x256xf32>
    %14 = arith.maximumf %12, %13 : vector<2x256xf32>
    %c0_12 = arith.constant 0 : index
    %c0_13 = arith.constant 0 : index
    %15 = vector.load %arg6[%c0_12, %c0_13] : memref<256x32xf32, #tpu.memory_space<vmem>>, vector<256x32xf32>
    %cst_14 = arith.constant dense<0.000000e+00> : vector<2x32xf32>
    %16 = tpu.matmul %14, %15, %cst_14 {dimension_numbers = #tpu.dot_dimension_numbers<[1], [0], [0], [1], [0, 0, 1, 1], [], []>} : vector<2x256xf32>, vector<256x32xf32>, vector<2x32xf32> -> vector<2x32xf32>
    %c0_15 = arith.constant 0 : index
    %c0_16 = arith.constant 0 : index
    %17 = vector.load %arg7[%c0_15, %c0_16] : memref<1x32xf32, #tpu.memory_space<vmem>>, vector<1x32xf32>
    %18 = vector.broadcast %17 : vector<1x32xf32> to vector<2x32xf32>
    %19 = arith.addf %16, %18 : vector<2x32xf32>
    %c0_17 = arith.constant 0 : index
    %c0_18 = arith.constant 0 : index
    %20 = vector.load %arg8[%c0_17, %c0_18] : memref<2x32xf32, #tpu.memory_space<vmem>>, vector<2x32xf32>
    tpu.vector_store %arg8[%c0_17, %c0_18], %19 {strides = array<i32>} : memref<2x32xf32, #tpu.memory_space<vmem>>, vector<2x32xf32>,
    return
  }
  func.func @transform_0(%arg0: i32) -> (i32, i32) {
    %c0_i32 = arith.constant 0 : i32
    %c0_i32_0 = arith.constant 0 : i32
    return %arg0, %c0_i32 : i32, i32
  }
  func.func @transform_1(%arg0: i32) -> (i32, i32) {
    %c0_i32 = arith.constant 0 : i32
    %c0_i32_0 = arith.constant 0 : i32
    %c0_i32_1 = arith.constant 0 : i32
    return %c0_i32, %c0_i32_0 : i32, i32
  }
  func.func @transform_2(%arg0: i32) -> (i32, i32) {
    %c0_i32 = arith.constant 0 : i32
    %c0_i32_0 = arith.constant 0 : i32
    %c0_i32_1 = arith.constant 0 : i32
    return %c0_i32, %c0_i32_0 : i32, i32
  }
  func.func @transform_3(%arg0: i32) -> (i32, i32) {
    %c0_i32 = arith.constant 0 : i32
    %c0_i32_0 = arith.constant 0 : i32
    %c0_i32_1 = arith.constant 0 : i32
    return %c0_i32, %c0_i32_0 : i32, i32
  }
  func.func @transform_4(%arg0: i32) -> (i32, i32) {
    %c0_i32 = arith.constant 0 : i32
    %c0_i32_0 = arith.constant 0 : i32
    %c0_i32_1 = arith.constant 0 : i32
    return %c0_i32, %c0_i32_0 : i32, i32
  }
  func.func @transform_5(%arg0: i32) -> (i32, i32) {
    %c0_i32 = arith.constant 0 : i32
    %c0_i32_0 = arith.constant 0 : i32
    %c0_i32_1 = arith.constant 0 : i32
    return %c0_i32, %c0_i32_0 : i32, i32
  }
  func.func @transform_6(%arg0: i32) -> (i32, i32) {
    %c0_i32 = arith.constant 0 : i32
    %c0_i32_0 = arith.constant 0 : i32
    %c0_i32_1 = arith.constant 0 : i32
    return %c0_i32, %c0_i32_0 : i32, i32
  }
  func.func @transform_7(%arg0: i32) -> (i32, i32) {
    %c0_i32 = arith.constant 0 : i32
    %c0_i32_0 = arith.constant 0 : i32
    return %arg0, %c0_i32 : i32, i32
  }
}

</mosaic_0001>

<llo_original>
// kernel: tpu_custom_call.1
$region0: #{tpu_custom_call.1}
  #allocation0 [shape = 'u32[]', space=smem, size = 0x4, offset = 0x4, fixed_abs, tag = 'smem constant byte address 0x4 - core index']
  #allocation1 [shape = 'u32[144,128]{1,0:T(1,128)}', space=vmem, size = 0x12000, scoped, tag = 'internal scratch']
  %s0 = inlined_call_operand.vmem [shape: f32[2,32], index: 0, kind: input, shape index: {}]
  %s1 = inlined_call_operand.vmem [shape: f32[32,512], index: 1, kind: input, shape index: {}]
  %s2 = inlined_call_operand.vmem [shape: f32[1,512], index: 2, kind: input, shape index: {}]
  %s3 = inlined_call_operand.hbm [shape: f32[512,256], index: 3, kind: input, shape index: {}]
  %s4 = inlined_call_operand.vmem [shape: f32[1,256], index: 4, kind: input, shape index: {}]
  %s5 = inlined_call_operand.vmem [shape: f32[256,32], index: 5, kind: input, shape index: {}]
  %s6 = inlined_call_operand.vmem [shape: f32[1,32], index: 6, kind: input, shape index: {}]
  %s7 = inlined_call_operand.hbm [shape: f32[2,32], index: 7, kind: output, shape index: {}]
  %s8 = sld [smem:[#allocation0]]
  $region42: #{tpu_custom_call.1} parent=0
    _
  %s10 = ssub.s32 1, %s8
  %s11 = scalar_select 0, %s10, %s8
  $region1: #{tpu_custom_call.1} parent=0
    #allocation2 [shape = 'u8[524288]{0}', space=vmem, size = 0x80000, scoped, tag = 'input window, operand 3, single buffered']
    #allocation3 [shape = 's32[1]{0}', space=sflag, size = 0x4, scoped, tag = 'scoped memory for tpu_custom_call.1']
    #allocation4 [shape = 's32[1]{0}', space=sflag, size = 0x4, scoped, tag = 'scoped memory for tpu_custom_call.1']
    #allocation5 [shape = 'u8[1024]{0}', space=vmem, size = 0x400, scoped, tag = 'output window, operand 0, single buffered']
    %12 = vsyncpa [#allocation3], 0
    %13 = vsyncpa [#allocation4], 0
    // Predicated region
    $region2: #{tpu_custom_call.1} parent=1 // pred_check
      _
    $region3: #{tpu_custom_call.1} parent=1 // pred_check_branch
      %15 = sbr.rel (0) target = $region5
    $region4: #{tpu_custom_call.1} parent=1 // pred_region
      _
    $region5: #{tpu_custom_call.1} parent=1 // pred_fallthru
      _
    // Predicated region
    $region6: #{tpu_custom_call.1} parent=1 // pred_check
      _
    $region7: #{tpu_custom_call.1} parent=1 // pred_check_branch
      %17 = sbr.rel (0) target = $region9
    $region8: #{tpu_custom_call.1} parent=1 // pred_region
      _
    $region9: #{tpu_custom_call.1} parent=1 // pred_fallthru
      _
    // Predicated region
    $region10: #{tpu_custom_call.1} parent=1 // pred_check
      _
    $region11: #{tpu_custom_call.1} parent=1 // pred_check_branch
      %19 = sbr.rel (0) target = $region13
    $region12: #{tpu_custom_call.1} parent=1 // pred_region
      _
    $region13: #{tpu_custom_call.1} parent=1 // pred_fallthru
      _
    // Predicated region
    $region14: #{tpu_custom_call.1} parent=1 // pred_check
      _
    $region15: #{tpu_custom_call.1} parent=1 // pred_check_branch
      %21 = sbr.rel (0) target = $region17
    $region16: #{tpu_custom_call.1} parent=1 // pred_region
      %s23 = ssub.s32 16384, 16384
      %24 = vsyncadd [#allocation3], %s23
      %s25 = sshll.u32 [#allocation2], 4
      %s26 = int_to_ptr.vmem [resolvable:$true] %s25
      %31 = dma.hbm_to_vmem [thread:$0]  %s3, 16384, %s26, [#allocation3], 256, 256, 16
    $region17: #{tpu_custom_call.1} parent=1 // pred_fallthru
      _
    // Predicated region
    $region18: #{tpu_custom_call.1} parent=1 // pred_check
      _
    $region19: #{tpu_custom_call.1} parent=1 // pred_check_branch
      %33 = sbr.rel (0) target = $region21
    $region20: #{tpu_custom_call.1} parent=1 // pred_region
      _
    $region21: #{tpu_custom_call.1} parent=1 // pred_fallthru
      _
    // Predicated region
    $region22: #{tpu_custom_call.1} parent=1 // pred_check
      _
    $region23: #{tpu_custom_call.1} parent=1 // pred_check_branch
      %35 = sbr.rel (0) target = $region25
    $region24: #{tpu_custom_call.1} parent=1 // pred_region
      _
    $region25: #{tpu_custom_call.1} parent=1 // pred_fallthru
      _
    // Predicated region
    $region26: #{tpu_custom_call.1} parent=1 // pred_check
      _
    $region27: #{tpu_custom_call.1} parent=1 // pred_check_branch
      %37 = sbr.rel (0) target = $region29
    $region28: #{tpu_custom_call.1} parent=1 // pred_region
      _
    $region29: #{tpu_custom_call.1} parent=1 // pred_fallthru
      _
    // Predicated region
    $region30: #{tpu_custom_call.1} parent=1 // pred_check
      _
    $region31: #{tpu_custom_call.1} parent=1 // pred_check_branch
      %39 = sbr.rel (0) target = $region33
    $region32: #{tpu_custom_call.1} parent=1 // pred_region
      %40 = dma.done [#allocation3], 16384
    $region33: #{tpu_custom_call.1} parent=1 // pred_fallthru
      _
    %v41 = vld [vmem:[%s0] sm:$0x3]
    %v42 = vld [vmem:[%s1] sm:$0xff]
    %v43 = vld [vmem:[%s1 + $0x8] sm:$0xff]
    %v44 = vld [vmem:[%s1 + $0x10] sm:$0xff]
    %v45 = vld [vmem:[%s1 + $0x18] sm:$0xff]
    %v46 = vld [vmem:[%s1 + $0x20] sm:$0xff]
    %v47 = vld [vmem:[%s1 + $0x28] sm:$0xff]
    %v48 = vld [vmem:[%s1 + $0x30] sm:$0xff]
    %v49 = vld [vmem:[%s1 + $0x38] sm:$0xff]
    %v50 = vld [vmem:[%s1 + $0x40] sm:$0xff]
    %v51 = vld [vmem:[%s1 + $0x48] sm:$0xff]
    %v52 = vld [vmem:[%s1 + $0x50] sm:$0xff]
    %v53 = vld [vmem:[%s1 + $0x58] sm:$0xff]
    %v54 = vld [vmem:[%s1 + $0x60] sm:$0xff]
    %v55 = vld [vmem:[%s1 + $0x68] sm:$0xff]
    %v56 = vld [vmem:[%s1 + $0x70] sm:$0xff]
    %v57 = vld [vmem:[%s1 + $0x78] sm:$0xff]
    %v58 = vld [vmem:[%s2] sm:$0xf]
    %v60 = vlaneseq
    %v61 = vshrl.u32 %v60, 7
    %v62 = vsub.s32 0, %v61
    %v63 = vrot.slane %v58, %v62
    %v64 = vlaneseq
    %v65 = vshrl.u32 %v64, 7
    %v66 = vsub.s32 1, %v65
    %v67 = vrot.slane %v58, %v66
    %v68 = vlaneseq
    %v69 = vshrl.u32 %v68, 7
    %v70 = vsub.s32 2, %v69
    %v71 = vrot.slane %v58, %v70
    %v72 = vlaneseq
    %v73 = vshrl.u32 %v72, 7
    %v74 = vsub.s32 3, %v73
    %v75 = vrot.slane %v58, %v74
    %vm80 = vcmask 261120
    %v82 = vsel %vm80, %v41, 0
    %84 = vmatprep.subr.mxu0 %v43
    %85 = vmatpush1.msra.mxu0 %v42
    %86 = vmatprep.subr.mxu0 %v47
    %87 = vmatpush1.msra.mxu0 %v46
    %88 = vmatprep.subr.mxu0 %v51
    %89 = vmatpush1.msra.mxu0 %v50
    %90 = vmatprep.subr.mxu0 %v55
    %91 = vmatpush1.msra.mxu0 %v54
    %92 = vmatprep.subr.mxu0 0.0
    %93 = vmatpush1.msra.mxu0 0.0
    %94 = vmatprep.subr.mxu0 0.0
    %95 = vmatpush1.msra.mxu0 0.0
    %96 = vmatprep.subr.mxu0 0.0
    %97 = vmatpush1.msra.mxu0 0.0
    %98 = vmatprep.subr.mxu0 0.0
    %99 = vmatpush1.msra.mxu0 0.0
    %100 = vmatprep.subr.mxu0 0.0
    %101 = vmatpush1.msra.mxu0 0.0
    %102 = vmatprep.subr.mxu0 0.0
    %103 = vmatpush1.msra.mxu0 0.0
    %104 = vmatprep.subr.mxu0 0.0
    %105 = vmatpush1.msra.mxu0 0.0
    %106 = vmatprep.subr.mxu0 0.0
    %107 = vmatpush1.msra.mxu0 0.0
    %108 = vmatprep.subr.mxu0 0.0
    %109 = vmatpush1.msra.mxu0 0.0
    %110 = vmatprep.subr.mxu0 0.0
    %111 = vmatpush1.msra.mxu0 0.0
    %112 = vmatprep.subr.mxu0 0.0
    %113 = vmatpush1.msra.mxu0 0.0
    %114 = vmatprep.subr.mxu0 0.0
    %115 = vmatpush1.msra.mxu0 0.0
    %116 = vmatprep.subr.mxu0 0.0
    %117 = vmatpush1.msra.mxu0 0.0
    %118 = vmatprep.subr.mxu0 0.0
    %119 = vmatpush1.msra.mxu0 0.0
    %120 = vmatprep.subr.mxu0 0.0
    %121 = vmatpush1.msra.mxu0 0.0
    %122 = vmatprep.subr.mxu0 0.0
    %123 = vmatpush1.msra.mxu0 0.0
    %124 = vmatprep.subr.mxu0 0.0
    %125 = vmatpush1.msra.mxu0 0.0
    %126 = vmatprep.subr.mxu0 0.0
    %127 = vmatpush1.msra.mxu0 0.0
    %128 = vmatprep.subr.mxu0 0.0
    %129 = vmatpush1.msra.mxu0 0.0
    %130 = vmatprep.subr.mxu0 0.0
    %131 = vmatpush1.msra.mxu0 0.0
    %132 = vmatprep.subr.mxu0 0.0
    %133 = vmatpush1.msra.mxu0 0.0
    %134 = vmatprep.subr.mxu0 0.0
    %135 = vmatpush1.msra.mxu0 0.0
    %136 = vmatprep.subr.mxu0 0.0
    %137 = vmatpush1.msra.mxu0 0.0
    %138 = vmatprep.subr.mxu0 0.0
    %139 = vmatpush1.msra.mxu0 0.0
    %140 = vmatprep.subr.mxu0 0.0
    %141 = vmatpush1.msra.mxu0 0.0
    %142 = vmatprep.subr.mxu0 0.0
    %143 = vmatpush1.msra.mxu0 0.0
    %144 = vmatprep.subr.mxu0 0.0
    %145 = vmatpush1.msra.mxu0 0.0
    %146 = vmatprep.subr.mxu0 0.0
    %147 = vmatpush1.msra.mxu0 0.0
    %148 = vmatprep.mubr.f32.mxu0 0.0
    %149 = vmatmul.mubr.f32.gmra.mrb[0].mxu0 %v82
    %v150 = vpop.f32.mrb[0].mxu0
    %v151 = vadd.f32 %v63, %v150
    %v152 = vpop.f32.mrb[0].mxu0
    %v153 = vadd.f32 %v67, %v152
    %154 = vdwg.mxu0
    %155 = vmatprep.subr.mxu0 %v45
    %156 = vmatpush1.msra.mxu0 %v44
    %157 = vmatprep.subr.mxu0 %v49
    %158 = vmatpush1.msra.mxu0 %v48
    %159 = vmatprep.subr.mxu0 %v53
    %160 = vmatpush1.msra.mxu0 %v52
    %161 = vmatprep.subr.mxu0 %v57
    %162 = vmatpush1.msra.mxu0 %v56
    %163 = vmatprep.subr.mxu0 0.0
    %164 = vmatpush1.msra.mxu0 0.0
    %165 = vmatprep.subr.mxu0 0.0
    %166 = vmatpush1.msra.mxu0 0.0
    %167 = vmatprep.subr.mxu0 0.0
    %168 = vmatpush1.msra.mxu0 0.0
    %169 = vmatprep.subr.mxu0 0.0
    %170 = vmatpush1.msra.mxu0 0.0
    %171 = vmatprep.subr.mxu0 0.0
    %172 = vmatpush1.msra.mxu0 0.0
    %173 = vmatprep.subr.mxu0 0.0
    %174 = vmatpush1.msra.mxu0 0.0
    %175 = vmatprep.subr.mxu0 0.0
    %176 = vmatpush1.msra.mxu0 0.0
    %177 = vmatprep.subr.mxu0 0.0
    %178 = vmatpush1.msra.mxu0 0.0
    %179 = vmatprep.subr.mxu0 0.0
    %180 = vmatpush1.msra.mxu0 0.0
    %181 = vmatprep.subr.mxu0 0.0
    %182 = vmatpush1.msra.mxu0 0.0
    %183 = vmatprep.subr.mxu0 0.0
    %184 = vmatpush1.msra.mxu0 0.0
    %185 = vmatprep.subr.mxu0 0.0
    %186 = vmatpush1.msra.mxu0 0.0
    %187 = vmatprep.subr.mxu0 0.0
    %188 = vmatpush1.msra.mxu0 0.0
    %189 = vmatprep.subr.mxu0 0.0
    %190 = vmatpush1.msra.mxu0 0.0
    %191 = vmatprep.subr.mxu0 0.0
    %192 = vmatpush1.msra.mxu0 0.0
    %193 = vmatprep.subr.mxu0 0.0
    %194 = vmatpush1.msra.mxu0 0.0
    %195 = vmatprep.subr.mxu0 0.0
    %196 = vmatpush1.msra.mxu0 0.0
    %197 = vmatprep.subr.mxu0 0.0
    %198 = vmatpush1.msra.mxu0 0.0
    %199 = vmatprep.subr.mxu0 0.0
    %200 = vmatpush1.msra.mxu0 0.0
    %201 = vmatprep.subr.mxu0 0.0
    %202 = vmatpush1.msra.mxu0 0.0
    %203 = vmatprep.subr.mxu0 0.0
    %204 = vmatpush1.msra.mxu0 0.0
    %205 = vmatprep.subr.mxu0 0.0
    %206 = vmatpush1.msra.mxu0 0.0
    %207 = vmatprep.subr.mxu0 0.0
    %208 = vmatpush1.msra.mxu0 0.0
    %209 = vmatprep.subr.mxu0 0.0
    %210 = vmatpush1.msra.mxu0 0.0
    %211 = vmatprep.subr.mxu0 0.0
    %212 = vmatpush1.msra.mxu0 0.0
    %213 = vmatprep.subr.mxu0 0.0
    %214 = vmatpush1.msra.mxu0 0.0
    %215 = vmatprep.subr.mxu0 0.0
    %216 = vmatpush1.msra.mxu0 0.0
    %217 = vmatprep.subr.mxu0 0.0
    %218 = vmatpush1.msra.mxu0 0.0
    %219 = vmatprep.mubr.f32.mxu0 0.0
    %220 = vmatmul.mubr.f32.gmra.mrb[0].mxu0 %v82
    %v221 = vpop.f32.mrb[0].mxu0
    %v222 = vadd.f32 %v71, %v221
    %v223 = vpop.f32.mrb[0].mxu0
    %v224 = vadd.f32 %v75, %v223
    %225 = vdwg.mxu0
    %v226 = vmax.f32 %v151, 0.0
    %v227 = vmax.f32 %v153, 0.0
    %v228 = vmax.f32 %v222, 0.0
    %v229 = vmax.f32 %v224, 0.0
    %v230 = vld [vmem:[#allocation2] sm:$0xff]
    %v231 = vld [vmem:[#allocation2 + $0x8] sm:$0xff]
    %v232 = vld [vmem:[#allocation2 + $0x10] sm:$0xff]
    %v233 = vld [vmem:[#allocation2 + $0x18] sm:$0xff]
    %v234 = vld [vmem:[#allocation2 + $0x20] sm:$0xff]
    %v235 = vld [vmem:[#allocation2 + $0x28] sm:$0xff]
    %v236 = vld [vmem:[#allocation2 + $0x30] sm:$0xff]
    %v237 = vld [vmem:[#allocation2 + $0x38] sm:$0xff]
    %v238 = vld [vmem:[#allocation2 + $0x40] sm:$0xff]
    %v239 = vld [vmem:[#allocation2 + $0x48] sm:$0xff]
    %v240 = vld [vmem:[#allocation2 + $0x50] sm:$0xff]
    %v241 = vld [vmem:[#allocation2 + $0x58] sm:$0xff]
    %v242 = vld [vmem:[#allocation2 + $0x60] sm:$0xff]
    %v243 = vld [vmem:[#allocation2 + $0x68] sm:$0xff]
    %v244 = vld [vmem:[#allocation2 + $0x70] sm:$0xff]
    %v245 = vld [vmem:[#allocation2 + $0x78] sm:$0xff]
    %v246 = vld [vmem:[#allocation2 + $0x80] sm:$0xff]
    %v247 = vld [vmem:[#allocation2 + $0x88] sm:$0xff]
    %v248 = vld [vmem:[#allocation2 + $0x90] sm:$0xff]
    %v249 = vld [vmem:[#allocation2 + $0x98] sm:$0xff]
    %v250 = vld [vmem:[#allocation2 + $0xa0] sm:$0xff]
    %v251 = vld [vmem:[#allocation2 + $0xa8] sm:$0xff]
    %v252 = vld [vmem:[#allocation2 + $0xb0] sm:$0xff]
    %v253 = vld [vmem:[#allocation2 + $0xb8] sm:$0xff]
    %v254 = vld [vmem:[#allocation2 + $0xc0] sm:$0xff]
    %v255 = vld [vmem:[#allocation2 + $0xc8] sm:$0xff]
    %v256 = vld [vmem:[#allocation2 + $0xd0] sm:$0xff]
    %v257 = vld [vmem:[#allocation2 + $0xd8] sm:$0xff]
    %v258 = vld [vmem:[#allocation2 + $0xe0] sm:$0xff]
    %v259 = vld [vmem:[#allocation2 + $0xe8] sm:$0xff]
    %v260 = vld [vmem:[#allocation2 + $0xf0] sm:$0xff]
    %v261 = vld [vmem:[#allocation2 + $0xf8] sm:$0xff]
    %v262 = vld [vmem:[#allocation2 + $0x100] sm:$0xff]
    %v263 = vld [vmem:[#allocation2 + $0x108] sm:$0xff]
    %v264 = vld [vmem:[#allocation2 + $0x110] sm:$0xff]
    %v265 = vld [vmem:[#allocation2 + $0x118] sm:$0xff]
    %v266 = vld [vmem:[#allocation2 + $0x120] sm:$0xff]
    %v267 = vld [vmem:[#allocation2 + $0x128] sm:$0xff]
    %v268 = vld [vmem:[#allocation2 + $0x130] sm:$0xff]
    %v269 = vld [vmem:[#allocation2 + $0x138] sm:$0xff]
    %v270 = vld [vmem:[#allocation2 + $0x140] sm:$0xff]
    %v271 = vld [vmem:[#allocation2 + $0x148] sm:$0xff]
    %v272 = vld [vmem:[#allocation2 + $0x150] sm:$0xff]
    %v273 = vld [vmem:[#allocation2 + $0x158] sm:$0xff]
    %v274 = vld [vmem:[#allocation2 + $0x160] sm:$0xff]
    %v275 = vld [vmem:[#allocation2 + $0x168] sm:$0xff]
    %v276 = vld [vmem:[#allocation2 + $0x170] sm:$0xff]
    %v277 = vld [vmem:[#allocation2 + $0x178] sm:$0xff]
    %v278 = vld [vmem:[#allocation2 + $0x180] sm:$0xff]
    %v279 = vld [vmem:[#allocation2 + $0x188] sm:$0xff]
    %v280 = vld [vmem:[#allocation2 + $0x190] sm:$0xff]
    %v281 = vld [vmem:[#allocation2 + $0x198] sm:$0xff]
    %v282 = vld [vmem:[#allocation2 + $0x1a0] sm:$0xff]
    %v283 = vld [vmem:[#allocation2 + $0x1a8] sm:$0xff]
    %v284 = vld [vmem:[#allocation2 + $0x1b0] sm:$0xff]
    %v285 = vld [vmem:[#allocation2 + $0x1b8] sm:$0xff]
    %v286 = vld [vmem:[#allocation2 + $0x1c0] sm:$0xff]
    %v287 = vld [vmem:[#allocation2 + $0x1c8] sm:$0xff]
    %v288 = vld [vmem:[#allocation2 + $0x1d0] sm:$0xff]
    %v289 = vld [vmem:[#allocation2 + $0x1d8] sm:$0xff]
    %v290 = vld [vmem:[#allocation2 + $0x1e0] sm:$0xff]
    %v291 = vld [vmem:[#allocation2 + $0x1e8] sm:$0xff]
    %v292 = vld [vmem:[#allocation2 + $0x1f0] sm:$0xff]
    %v293 = vld [vmem:[#allocation2 + $0x1f8] sm:$0xff]
    %v294 = vld [vmem:[#allocation2 + $0x200] sm:$0xff]
    %v295 = vld [vmem:[#allocation2 + $0x208] sm:$0xff]
    %v296 = vld [vmem:[#allocation2 + $0x210] sm:$0xff]
    %v297 = vld [vmem:[#allocation2 + $0x218] sm:$0xff]
    %v298 = vld [vmem:[#allocation2 + $0x220] sm:$0xff]
    %v299 = vld [vmem:[#allocation2 + $0x228] sm:$0xff]
    %v300 = vld [vmem:[#allocation2 + $0x230] sm:$0xff]
    %v301 = vld [vmem:[#allocation2 + $0x238] sm:$0xff]
    %v302 = vld [vmem:[#allocation2 + $0x240] sm:$0xff]
    %v303 = vld [vmem:[#allocation2 + $0x248] sm:$0xff]
    %v304 = vld [vmem:[#allocation2 + $0x250] sm:$0xff]
    %v305 = vld [vmem:[#allocation2 + $0x258] sm:$0xff]
    %v306 = vld [vmem:[#allocation2 + $0x260] sm:$0xff]
    %v307 = vld [vmem:[#allocation2 + $0x268] sm:$0xff]
    %v308 = vld [vmem:[#allocation2 + $0x270] sm:$0xff]
    %v309 = vld [vmem:[#allocation2 + $0x278] sm:$0xff]
    %v310 = vld [vmem:[#allocation2 + $0x280] sm:$0xff]
    %v311 = vld [vmem:[#allocation2 + $0x288] sm:$0xff]
    %v312 = vld [vmem:[#allocation2 + $0x290] sm:$0xff]
    %v313 = vld [vmem:[#allocation2 + $0x298] sm:$0xff]
    %v314 = vld [vmem:[#allocation2 + $0x2a0] sm:$0xff]
    %v315 = vld [vmem:[#allocation2 + $0x2a8] sm:$0xff]
    %v316 = vld [vmem:[#allocation2 + $0x2b0] sm:$0xff]
    %v317 = vld [vmem:[#allocation2 + $0x2b8] sm:$0xff]
    %v318 = vld [vmem:[#allocation2 + $0x2c0] sm:$0xff]
    %v319 = vld [vmem:[#allocation2 + $0x2c8] sm:$0xff]
    %v320 = vld [vmem:[#allocation2 + $0x2d0] sm:$0xff]
    %v321 = vld [vmem:[#allocation2 + $0x2d8] sm:$0xff]
    %v322 = vld [vmem:[#allocation2 + $0x2e0] sm:$0xff]
    %v323 = vld [vmem:[#allocation2 + $0x2e8] sm:$0xff]
    %v324 = vld [vmem:[#allocation2 + $0x2f0] sm:$0xff]
    %v325 = vld [vmem:[#allocation2 + $0x2f8] sm:$0xff]
    %v326 = vld [vmem:[#allocation2 + $0x300] sm:$0xff]
    %v327 = vld [vmem:[#allocation2 + $0x308] sm:$0xff]
    %v328 = vld [vmem:[#allocation2 + $0x310] sm:$0xff]
    %v329 = vld [vmem:[#allocation2 + $0x318] sm:$0xff]
    %v330 = vld [vmem:[#allocation2 + $0x320] sm:$0xff]
    %v331 = vld [vmem:[#allocation2 + $0x328] sm:$0xff]
    %v332 = vld [vmem:[#allocation2 + $0x330] sm:$0xff]
    %v333 = vld [vmem:[#allocation2 + $0x338] sm:$0xff]
    %v334 = vld [vmem:[#allocation2 + $0x340] sm:$0xff]
    %v335 = vld [vmem:[#allocation2 + $0x348] sm:$0xff]
    %v336 = vld [vmem:[#allocation2 + $0x350] sm:$0xff]
    %v337 = vld [vmem:[#allocation2 + $0x358] sm:$0xff]
    %v338 = vld [vmem:[#allocation2 + $0x360] sm:$0xff]
    %v339 = vld [vmem:[#allocation2 + $0x368] sm:$0xff]
    %v340 = vld [vmem:[#allocation2 + $0x370] sm:$0xff]
    %v341 = vld [vmem:[#allocation2 + $0x378] sm:$0xff]
    %v342 = vld [vmem:[#allocation2 + $0x380] sm:$0xff]
    %v343 = vld [vmem:[#allocation2 + $0x388] sm:$0xff]
    %v344 = vld [vmem:[#allocation2 + $0x390] sm:$0xff]
    %v345 = vld [vmem:[#allocation2 + $0x398] sm:$0xff]
    %v346 = vld [vmem:[#allocation2 + $0x3a0] sm:$0xff]
    %v347 = vld [vmem:[#allocation2 + $0x3a8] sm:$0xff]
    %v348 = vld [vmem:[#allocation2 + $0x3b0] sm:$0xff]
    %v349 = vld [vmem:[#allocation2 + $0x3b8] sm:$0xff]
    %v350 = vld [vmem:[#allocation2 + $0x3c0] sm:$0xff]
    %v351 = vld [vmem:[#allocation2 + $0x3c8] sm:$0xff]
    %v352 = vld [vmem:[#allocation2 + $0x3d0] sm:$0xff]
    %v353 = vld [vmem:[#allocation2 + $0x3d8] sm:$0xff]
    %v354 = vld [vmem:[#allocation2 + $0x3e0] sm:$0xff]
    %v355 = vld [vmem:[#allocation2 + $0x3e8] sm:$0xff]
    %v356 = vld [vmem:[#allocation2 + $0x3f0] sm:$0xff]
    %v357 = vld [vmem:[#allocation2 + $0x3f8] sm:$0xff]
    %v358 = vld [vmem:[%s4] sm:$0x3]
    %v360 = vlaneseq
    %v361 = vshrl.u32 %v360, 7
    %v362 = vsub.s32 0, %v361
    %v363 = vrot.slane %v358, %v362
    %v364 = vlaneseq
    %v365 = vshrl.u32 %v364, 7
    %v366 = vsub.s32 1, %v365
    %v367 = vrot.slane %v358, %v366
    %370 = vmatprep.subr.mxu0 %v231
    %371 = vmatpush1.msra.mxu0 %v230
    %372 = vmatprep.subr.mxu0 %v233
    %373 = vmatpush1.msra.mxu0 %v232
    %374 = vmatprep.subr.mxu0 %v235
    %375 = vmatpush1.msra.mxu0 %v234
    %376 = vmatprep.subr.mxu0 %v237
    %377 = vmatpush1.msra.mxu0 %v236
    %378 = vmatprep.subr.mxu0 %v239
    %379 = vmatpush1.msra.mxu0 %v238
    %380 = vmatprep.subr.mxu0 %v241
    %381 = vmatpush1.msra.mxu0 %v240
    %382 = vmatprep.subr.mxu0 %v243
    %383 = vmatpush1.msra.mxu0 %v242
    %384 = vmatprep.subr.mxu0 %v245
    %385 = vmatpush1.msra.mxu0 %v244
    %386 = vmatprep.subr.mxu0 %v247
    %387 = vmatpush1.msra.mxu0 %v246
    %388 = vmatprep.subr.mxu0 %v249
    %389 = vmatpush1.msra.mxu0 %v248
    %390 = vmatprep.subr.mxu0 %v251
    %391 = vmatpush1.msra.mxu0 %v250
    %392 = vmatprep.subr.mxu0 %v253
    %393 = vmatpush1.msra.mxu0 %v252
    %394 = vmatprep.subr.mxu0 %v255
    %395 = vmatpush1.msra.mxu0 %v254
    %396 = vmatprep.subr.mxu0 %v257
    %397 = vmatpush1.msra.mxu0 %v256
    %398 = vmatprep.subr.mxu0 %v259
    %399 = vmatpush1.msra.mxu0 %v258
    %400 = vmatprep.subr.mxu0 %v261
    %401 = vmatpush1.msra.mxu0 %v260
    %402 = vmatprep.subr.mxu0 %v263
    %403 = vmatpush1.msra.mxu0 %v262
    %404 = vmatprep.subr.mxu0 %v265
    %405 = vmatpush1.msra.mxu0 %v264
    %406 = vmatprep.subr.mxu0 %v267
    %407 = vmatpush1.msra.mxu0 %v266
    %408 = vmatprep.subr.mxu0 %v269
    %409 = vmatpush1.msra.mxu0 %v268
    %410 = vmatprep.subr.mxu0 %v271
    %411 = vmatpush1.msra.mxu0 %v270
    %412 = vmatprep.subr.mxu0 %v273
    %413 = vmatpush1.msra.mxu0 %v272
    %414 = vmatprep.subr.mxu0 %v275
    %415 = vmatpush1.msra.mxu0 %v274
    %416 = vmatprep.subr.mxu0 %v277
    %417 = vmatpush1.msra.mxu0 %v276
    %418 = vmatprep.subr.mxu0 %v279
    %419 = vmatpush1.msra.mxu0 %v278
    %420 = vmatprep.subr.mxu0 %v281
    %421 = vmatpush1.msra.mxu0 %v280
    %422 = vmatprep.subr.mxu0 %v283
    %423 = vmatpush1.msra.mxu0 %v282
    %424 = vmatprep.subr.mxu0 %v285
    %425 = vmatpush1.msra.mxu0 %v284
    %426 = vmatprep.subr.mxu0 %v287
    %427 = vmatpush1.msra.mxu0 %v286
    %428 = vmatprep.subr.mxu0 %v289
    %429 = vmatpush1.msra.mxu0 %v288
    %430 = vmatprep.subr.mxu0 %v291
    %431 = vmatpush1.msra.mxu0 %v290
    %432 = vmatprep.subr.mxu0 %v293
    %433 = vmatpush1.msra.mxu0 %v292
    %434 = vmatprep.mubr.f32.mxu0 %v227
    %435 = vmatmul.mubr.f32.gmra.mrb[0].mxu0 %v226
    %v436 = vpop.f32.mrb[0].mxu0
    %v437 = vadd.f32 %v363, %v436
    %v438 = vpop.f32.mrb[0].mxu0
    %v439 = vadd.f32 %v367, %v438
    %440 = vdwg.mxu0
    %441 = vmatprep.subr.mxu0 %v295
    %442 = vmatpush1.msra.mxu0 %v294
    %443 = vmatprep.subr.mxu0 %v297
    %444 = vmatpush1.msra.mxu0 %v296
    %445 = vmatprep.subr.mxu0 %v299
    %446 = vmatpush1.msra.mxu0 %v298
    %447 = vmatprep.subr.mxu0 %v301
    %448 = vmatpush1.msra.mxu0 %v300
    %449 = vmatprep.subr.mxu0 %v303
    %450 = vmatpush1.msra.mxu0 %v302
    %451 = vmatprep.subr.mxu0 %v305
    %452 = vmatpush1.msra.mxu0 %v304
    %453 = vmatprep.subr.mxu0 %v307
    %454 = vmatpush1.msra.mxu0 %v306
    %455 = vmatprep.subr.mxu0 %v309
    %456 = vmatpush1.msra.mxu0 %v308
    %457 = vmatprep.subr.mxu0 %v311
    %458 = vmatpush1.msra.mxu0 %v310
    %459 = vmatprep.subr.mxu0 %v313
    %460 = vmatpush1.msra.mxu0 %v312
    %461 = vmatprep.subr.mxu0 %v315
    %462 = vmatpush1.msra.mxu0 %v314
    %463 = vmatprep.subr.mxu0 %v317
    %464 = vmatpush1.msra.mxu0 %v316
    %465 = vmatprep.subr.mxu0 %v319
    %466 = vmatpush1.msra.mxu0 %v318
    %467 = vmatprep.subr.mxu0 %v321
    %468 = vmatpush1.msra.mxu0 %v320
    %469 = vmatprep.subr.mxu0 %v323
    %470 = vmatpush1.msra.mxu0 %v322
    %471 = vmatprep.subr.mxu0 %v325
    %472 = vmatpush1.msra.mxu0 %v324
    %473 = vmatprep.subr.mxu0 %v327
    %474 = vmatpush1.msra.mxu0 %v326
    %475 = vmatprep.subr.mxu0 %v329
    %476 = vmatpush1.msra.mxu0 %v328
    %477 = vmatprep.subr.mxu0 %v331
    %478 = vmatpush1.msra.mxu0 %v330
    %479 = vmatprep.subr.mxu0 %v333
    %480 = vmatpush1.msra.mxu0 %v332
    %481 = vmatprep.subr.mxu0 %v335
    %482 = vmatpush1.msra.mxu0 %v334
    %483 = vmatprep.subr.mxu0 %v337
    %484 = vmatpush1.msra.mxu0 %v336
    %485 = vmatprep.subr.mxu0 %v339
    %486 = vmatpush1.msra.mxu0 %v338
    %487 = vmatprep.subr.mxu0 %v341
    %488 = vmatpush1.msra.mxu0 %v340
    %489 = vmatprep.subr.mxu0 %v343
    %490 = vmatpush1.msra.mxu0 %v342
    %491 = vmatprep.subr.mxu0 %v345
    %492 = vmatpush1.msra.mxu0 %v344
    %493 = vmatprep.subr.mxu0 %v347
    %494 = vmatpush1.msra.mxu0 %v346
    %495 = vmatprep.subr.mxu0 %v349
    %496 = vmatpush1.msra.mxu0 %v348
    %497 = vmatprep.subr.mxu0 %v351
    %498 = vmatpush1.msra.mxu0 %v350
    %499 = vmatprep.subr.mxu0 %v353
    %500 = vmatpush1.msra.mxu0 %v352
    %501 = vmatprep.subr.mxu0 %v355
    %502 = vmatpush1.msra.mxu0 %v354
    %503 = vmatprep.subr.mxu0 %v357
    %504 = vmatpush1.msra.mxu0 %v356
    %505 = vmatprep.mubr.f32.mxu0 %v229
    %506 = vmatmul.mubr.f32.gmra.mrb[0].mxu0 %v228
    %v507 = vpop.f32.mrb[0].mxu0
    %v508 = vadd.f32 %v437, %v507
    %v509 = vpop.f32.mrb[0].mxu0
    %v510 = vadd.f32 %v439, %v509
    %511 = vdwg.mxu0
    %v512 = vmax.f32 %v508, 0.0
    %v513 = vmax.f32 %v510, 0.0
    %v514 = vld [vmem:[%s5] sm:$0xff]
    %v515 = vld [vmem:[%s5 + $0x8] sm:$0xff]
    %v516 = vld [vmem:[%s5 + $0x10] sm:$0xff]
    %v517 = vld [vmem:[%s5 + $0x18] sm:$0xff]
    %v518 = vld [vmem:[%s5 + $0x20] sm:$0xff]
    %v519 = vld [vmem:[%s5 + $0x28] sm:$0xff]
    %v520 = vld [vmem:[%s5 + $0x30] sm:$0xff]
    %v521 = vld [vmem:[%s5 + $0x38] sm:$0xff]
    %v522 = vld [vmem:[%s5 + $0x40] sm:$0xff]
    %v523 = vld [vmem:[%s5 + $0x48] sm:$0xff]
    %v524 = vld [vmem:[%s5 + $0x50] sm:$0xff]
    %v525 = vld [vmem:[%s5 + $0x58] sm:$0xff]
    %v526 = vld [vmem:[%s5 + $0x60] sm:$0xff]
    %v527 = vld [vmem:[%s5 + $0x68] sm:$0xff]
    %v528 = vld [vmem:[%s5 + $0x70] sm:$0xff]
    %v529 = vld [vmem:[%s5 + $0x78] sm:$0xff]
    %v530 = vld [vmem:[%s5 + $0x80] sm:$0xff]
    %v531 = vld [vmem:[%s5 + $0x88] sm:$0xff]
    %v532 = vld [vmem:[%s5 + $0x90] sm:$0xff]
    %v533 = vld [vmem:[%s5 + $0x98] sm:$0xff]
    %v534 = vld [vmem:[%s5 + $0xa0] sm:$0xff]
    %v535 = vld [vmem:[%s5 + $0xa8] sm:$0xff]
    %v536 = vld [vmem:[%s5 + $0xb0] sm:$0xff]
    %v537 = vld [vmem:[%s5 + $0xb8] sm:$0xff]
    %v538 = vld [vmem:[%s5 + $0xc0] sm:$0xff]
    %v539 = vld [vmem:[%s5 + $0xc8] sm:$0xff]
    %v540 = vld [vmem:[%s5 + $0xd0] sm:$0xff]
    %v541 = vld [vmem:[%s5 + $0xd8] sm:$0xff]
    %v542 = vld [vmem:[%s5 + $0xe0] sm:$0xff]
    %v543 = vld [vmem:[%s5 + $0xe8] sm:$0xff]
    %v544 = vld [vmem:[%s5 + $0xf0] sm:$0xff]
    %v545 = vld [vmem:[%s5 + $0xf8] sm:$0xff]
    %v546 = vld [vmem:[%s6] sm:$0x1]
    %v548 = vlaneseq
    %v549 = vshrl.u32 %v548, 7
    %v550 = vsub.s32 0, %v549
    %v551 = vrot.slane %v546, %v550
    %553 = vmatprep.subr.mxu0 0.0
    %554 = vmatpush1.msra.mxu0 %v514
    %555 = vmatprep.subr.mxu0 0.0
    %556 = vmatpush1.msra.mxu0 %v515
    %557 = vmatprep.subr.mxu0 0.0
    %558 = vmatpush1.msra.mxu0 %v516
    %559 = vmatprep.subr.mxu0 0.0
    %560 = vmatpush1.msra.mxu0 %v517
    %561 = vmatprep.subr.mxu0 0.0
    %562 = vmatpush1.msra.mxu0 %v518
    %563 = vmatprep.subr.mxu0 0.0
    %564 = vmatpush1.msra.mxu0 %v519
    %565 = vmatprep.subr.mxu0 0.0
    %566 = vmatpush1.msra.mxu0 %v520
    %567 = vmatprep.subr.mxu0 0.0
    %568 = vmatpush1.msra.mxu0 %v521
    %569 = vmatprep.subr.mxu0 0.0
    %570 = vmatpush1.msra.mxu0 %v522
    %571 = vmatprep.subr.mxu0 0.0
    %572 = vmatpush1.msra.mxu0 %v523
    %573 = vmatprep.subr.mxu0 0.0
    %574 = vmatpush1.msra.mxu0 %v524
    %575 = vmatprep.subr.mxu0 0.0
    %576 = vmatpush1.msra.mxu0 %v525
    %577 = vmatprep.subr.mxu0 0.0
    %578 = vmatpush1.msra.mxu0 %v526
    %579 = vmatprep.subr.mxu0 0.0
    %580 = vmatpush1.msra.mxu0 %v527
    %581 = vmatprep.subr.mxu0 0.0
    %582 = vmatpush1.msra.mxu0 %v528
    %583 = vmatprep.subr.mxu0 0.0
    %584 = vmatpush1.msra.mxu0 %v529
    %585 = vmatprep.subr.mxu0 0.0
    %586 = vmatpush1.msra.mxu0 %v530
    %587 = vmatprep.subr.mxu0 0.0
    %588 = vmatpush1.msra.mxu0 %v531
    %589 = vmatprep.subr.mxu0 0.0
    %590 = vmatpush1.msra.mxu0 %v532
    %591 = vmatprep.subr.mxu0 0.0
    %592 = vmatpush1.msra.mxu0 %v533
    %593 = vmatprep.subr.mxu0 0.0
    %594 = vmatpush1.msra.mxu0 %v534
    %595 = vmatprep.subr.mxu0 0.0
    %596 = vmatpush1.msra.mxu0 %v535
    %597 = vmatprep.subr.mxu0 0.0
    %598 = vmatpush1.msra.mxu0 %v536
    %599 = vmatprep.subr.mxu0 0.0
    %600 = vmatpush1.msra.mxu0 %v537
    %601 = vmatprep.subr.mxu0 0.0
    %602 = vmatpush1.msra.mxu0 %v538
    %603 = vmatprep.subr.mxu0 0.0
    %604 = vmatpush1.msra.mxu0 %v539
    %605 = vmatprep.subr.mxu0 0.0
    %606 = vmatpush1.msra.mxu0 %v540
    %607 = vmatprep.subr.mxu0 0.0
    %608 = vmatpush1.msra.mxu0 %v541
    %609 = vmatprep.subr.mxu0 0.0
    %610 = vmatpush1.msra.mxu0 %v542
    %611 = vmatprep.subr.mxu0 0.0
    %612 = vmatpush1.msra.mxu0 %v543
    %613 = vmatprep.subr.mxu0 0.0
    %614 = vmatpush1.msra.mxu0 %v544
    %615 = vmatprep.subr.mxu0 0.0
    %616 = vmatpush1.msra.mxu0 %v545
    %617 = vmatprep.mubr.f32.mxu0 %v513
    %618 = vmatmul.mubr.f32.gmra.mrb[0].mxu0 %v512
    %v619 = vpop.f32.mrb[0].mxu0
    %v620 = vadd.f32 %v551, %v619
    %v621 = vpop.f32.mrb[0].mxu0
    %622 = vdwg.mxu0
    %vm623 = vcmask 254976
    %624 = vst.msk [vmem:[#allocation5] sm:$0x3] %vm623, %v620
    // Predicated region
    $region34: #{tpu_custom_call.1} parent=1 // pred_check
      _
    $region35: #{tpu_custom_call.1} parent=1 // pred_check_branch
      %626 = sbr.rel (0) target = $region37
    $region36: #{tpu_custom_call.1} parent=1 // pred_region
      %s628 = ssub.s32 32, 32
      %629 = vsyncadd [#allocation4], %s628
      %s631 = sshll.u32 [#allocation5], 4
      %s632 = int_to_ptr.vmem [resolvable:$true] %s631
      %634 = dma.vmem_to_hbm [thread:$0]  %s632, 32, %s7, [#allocation4]
    $region37: #{tpu_custom_call.1} parent=1 // pred_fallthru
      _
    // Predicated region
    $region38: #{tpu_custom_call.1} parent=1 // pred_check
      _
    $region39: #{tpu_custom_call.1} parent=1 // pred_check_branch
      %636 = sbr.rel (0) target = $region41
    $region40: #{tpu_custom_call.1} parent=1 // pred_region
      %637 = dma.done [#allocation4], 32
    $region41: #{tpu_custom_call.1} parent=1 // pred_fallthru
      _
    %638 = vsyncpa [#allocation3], 1
    %639 = vsyncpa [#allocation4], 1

</llo_original>
